<compile_context>
chip_gen: v7x
topology: tpu7x:2x2x1
jax: 0.10.0
libtpu: 0.0.40
codegen_flags: <defaults>
</compile_context>

<pallas_src>
import math
import functools

import jax
import jax.numpy as jnp
from jax.experimental import pallas as pl
from jax.experimental.pallas import tpu as pltpu


def _self_attention_kernel(x_ref, w_ref, b_ref, mask_ref, o_ref, *,
                           block_b, S, dk):
    # ---- fused QKV projection: one MXU matmul with M = block_b * S rows ----
    x = x_ref[...]                                                # (Bb*S, d)  bf16
    qkv = jnp.dot(x, w_ref[...], preferred_element_type=jnp.float32)
    qkv = qkv + b_ref[...]                                        # (Bb*S, 3*dk) f32
    qkv = qkv.reshape(block_b, S, 3 * dk)

    # 1/sqrt(dk) is already folded into Wq / bq in the wrapper.
    q = qkv[:, :, 0:dk].astype(jnp.bfloat16)
    k = qkv[:, :, dk:2 * dk].astype(jnp.bfloat16)
    v = qkv[:, :, 2 * dk:3 * dk].astype(jnp.bfloat16)

    # ---- scores: batched contraction over the last dims (no K transpose) ----
    s = jnp.einsum("bqd,bkd->bqk", q, k,
                   preferred_element_type=jnp.float32)            # (Bb, S, S) f32
    s = s + mask_ref[...]

    # ---- softmax in f32 (VPU + EUP) ----
    m = jnp.max(s, axis=-1, keepdims=True)
    p = jnp.exp(s - m)
    denom = jnp.sum(p, axis=-1, keepdims=True)
    attn = p * pl.reciprocal(denom, approx=True)

    # ---- weighted sum of V on the MXU ----
    out = jnp.einsum("bqk,bkd->bqd", attn.astype(jnp.bfloat16), v,
                     preferred_element_type=jnp.float32)
    o_ref[...] = out.astype(o_ref.dtype)


def self_attention_pallas(x, mask, wq, bq, wk, bk, wv, bv, *, block_b=None):
    """x: (B, S, d) f32, mask: (B, S, S) additive f32,
    weights stored as (d, dk) (transposed vs torch Linear), biases (dk,)."""
    B, S, d = x.shape
    dk = wq.shape[1]
    scale = 1.0 / math.sqrt(dk)

    if block_b is None:
        block_b = B                       # tiny problem: whole batch, single grid step
    assert B % block_b == 0
    grid = (B // block_b,)

    # Fuse QKV and fold the score scale into the Q projection (done once, in f32).
    w_qkv = jnp.concatenate([wq * scale, wk, wv], axis=1)          # (d, 3*dk)
    b_qkv = jnp.concatenate([bq * scale, bk, bv]).reshape(1, 3 * dk)

    # bf16 MXU inputs (accumulation stays f32 inside the kernel); halves HBM bytes.
    x2 = x.reshape(B * S, d).astype(jnp.bfloat16)
    w_qkv = w_qkv.astype(jnp.bfloat16)

    kernel = functools.partial(_self_attention_kernel,
                               block_b=block_b, S=S, dk=dk)

    return pl.pallas_call(
        kernel,
        out_shape=jax.ShapeDtypeStruct((B, S, dk), jnp.float32),
        grid_spec=pltpu.PrefetchScalarGridSpec(
            num_scalar_prefetch=0,
            grid=grid,
            in_specs=[
                pl.BlockSpec((block_b * S, d), lambda b: (b, 0)),    # x (rows flattened)
                pl.BlockSpec((d, 3 * dk), lambda b: (0, 0)),         # fused W_qkv
                pl.BlockSpec((1, 3 * dk), lambda b: (0, 0)),         # fused b_qkv
                pl.BlockSpec((block_b, S, S), lambda b: (b, 0, 0)),  # additive mask
            ],
            out_specs=pl.BlockSpec((block_b, S, dk), lambda b: (b, 0, 0)),
        ),
        compiler_params=pltpu.CompilerParams(
            dimension_semantics=("parallel",)),
    )(x2, w_qkv, b_qkv, mask)


def self_attention_ref(x, mask, wq, bq, wk, bk, wv, bv):
    """Pure-JAX f32 reference mirroring torch F.scaled_dot_product_attention (eval)."""
    dk = wq.shape[1]
    q = x @ wq + bq
    k = x @ wk + bk
    v = x @ wv + bv
    s = jnp.einsum("bqd,bkd->bqk", q, k) / math.sqrt(dk) + mask
    p = jax.nn.softmax(s, axis=-1)
    return jnp.einsum("bqk,bkd->bqd", p, v)


if __name__ == "__main__":
    B, S, d, dk = 2, 8, 32, 16

    key = jax.random.PRNGKey(0)
    kx, km, kwq, kbq, kwk, kbk, kwv, kbv = jax.random.split(key, 8)

    x = jax.random.normal(kx, (B, S, d), dtype=jnp.float32)

    # Additive float attention mask: 0 where attended, -1e9 where masked
    # (diagonal kept unmasked so no row is fully masked -> no NaNs).
    keep = jax.random.uniform(km, (B, S, S)) > 0.3
    keep = keep | jnp.eye(S, dtype=bool)[None]
    mask = jnp.where(keep, 0.0, -1e9).astype(jnp.float32)

    # Deterministic parameter init (Linear(d, dk); weights stored as (d, dk)).
    bound = 1.0 / math.sqrt(d)
    wq = jax.random.uniform(kwq, (d, dk), minval=-bound, maxval=bound, dtype=jnp.float32)
    bq = jax.random.uniform(kbq, (dk,), minval=-bound, maxval=bound, dtype=jnp.float32)
    wk = jax.random.uniform(kwk, (d, dk), minval=-bound, maxval=bound, dtype=jnp.float32)
    bk = jax.random.uniform(kbk, (dk,), minval=-bound, maxval=bound, dtype=jnp.float32)
    wv = jax.random.uniform(kwv, (d, dk), minval=-bound, maxval=bound, dtype=jnp.float32)
    bv = jax.random.uniform(kbv, (dk,), minval=-bound, maxval=bound, dtype=jnp.float32)

    out = self_attention_pallas(x, mask, wq, bq, wk, bk, wv, bv)
    out = jax.block_until_ready(out)

    ref = self_attention_ref(x, mask, wq, bq, wk, bk, wv, bv)
    assert out.shape == (B, S, dk)
    # Tolerance loosened for bf16 MXU inputs + approx EUP reciprocal (f32 accum/softmax).
    assert jnp.allclose(out, ref, atol=5e-2, rtol=5e-2), "mismatch vs reference"

    print("KERNEL_OK")
</pallas_src>

<mosaic_0001>
module attributes {stable_mosaic.version = 11 : i64} {
  func.func @_self_attention_kernel(%arg0: i32, %arg1: memref<16x32xbf16, #tpu.memory_space<vmem>>, %arg2: memref<32x48xbf16, #tpu.memory_space<vmem>>, %arg3: memref<1x48xf32, #tpu.memory_space<vmem>>, %arg4: memref<2x8x8xf32, #tpu.memory_space<vmem>>, %arg5: memref<2x8x16xf32, #tpu.memory_space<vmem>>) attributes {dimension_semantics = [#tpu.dimension_semantics<parallel>], iteration_bounds = array<i64: 1>, scalar_prefetch = 0 : i64, scratch_operands = 0 : i64, tpu.core_type = #tpu.core_type<tc>, window_params = [{transform_indices = @transform_0, window_bounds = array<i64: 16, 32>}, {pipeline_mode = #tpu.pipeline_mode<synchronous>, transform_indices = @transform_1, window_bounds = array<i64: 32, 48>}, {pipeline_mode = #tpu.pipeline_mode<synchronous>, transform_indices = @transform_2, window_bounds = array<i64: 1, 48>}, {transform_indices = @transform_3, window_bounds = array<i64: 2, 8, 8>}, {transform_indices = @transform_4, window_bounds = array<i64: 2, 8, 16>}]} {
    %c0 = arith.constant 0 : index
    %c0_0 = arith.constant 0 : index
    %0 = vector.load %arg1[%c0, %c0_0] : memref<16x32xbf16, #tpu.memory_space<vmem>>, vector<16x32xbf16>
    %c0_1 = arith.constant 0 : index
    %c0_2 = arith.constant 0 : index
    %1 = vector.load %arg2[%c0_1, %c0_2] : memref<32x48xbf16, #tpu.memory_space<vmem>>, vector<32x48xbf16>
    %cst = arith.constant dense<0.000000e+00> : vector<16x48xf32>
    %2 = tpu.matmul %0, %1, %cst {dimension_numbers = #tpu.dot_dimension_numbers<[1], [0], [0], [1], [0, 0, 1, 1], [], []>} : vector<16x32xbf16>, vector<32x48xbf16>, vector<16x48xf32> -> vector<16x48xf32>
    %c0_3 = arith.constant 0 : index
    %c0_4 = arith.constant 0 : index
    %3 = vector.load %arg3[%c0_3, %c0_4] : memref<1x48xf32, #tpu.memory_space<vmem>>, vector<1x48xf32>
    %4 = vector.broadcast %3 : vector<1x48xf32> to vector<16x48xf32>
    %5 = arith.addf %2, %4 : vector<16x48xf32>
    %6 = vector.shape_cast %5 : vector<16x48xf32> to vector<2x8x48xf32>
    %7 = vector.extract_strided_slice %6 {offsets = [0, 0, 0], sizes = [2, 8, 16], strides = [1, 1, 1]} : vector<2x8x48xf32> to vector<2x8x16xf32>
    %8 = arith.truncf %7 : vector<2x8x16xf32> to vector<2x8x16xbf16>
    %9 = vector.extract_strided_slice %6 {offsets = [0, 0, 16], sizes = [2, 8, 16], strides = [1, 1, 1]} : vector<2x8x48xf32> to vector<2x8x16xf32>
    %10 = arith.truncf %9 : vector<2x8x16xf32> to vector<2x8x16xbf16>
    %11 = vector.extract_strided_slice %6 {offsets = [0, 0, 32], sizes = [2, 8, 16], strides = [1, 1, 1]} : vector<2x8x48xf32> to vector<2x8x16xf32>
    %12 = arith.truncf %11 : vector<2x8x16xf32> to vector<2x8x16xbf16>
    "tpu.trace_start"() <{level = 10 : i32, message = "bqd,bkd->bqk"}> : () -> ()
    %cst_5 = arith.constant dense<0.000000e+00> : vector<2x8x8xf32>
    %13 = tpu.matmul %8, %10, %cst_5 {dimension_numbers = #tpu.dot_dimension_numbers<[2], [2], [1], [1], [0, 0, 0, 1, 1, 1], [0], [0]>} : vector<2x8x16xbf16>, vector<2x8x16xbf16>, vector<2x8x8xf32> -> vector<2x8x8xf32>
    "tpu.trace_stop"() : () -> ()
    %c0_6 = arith.constant 0 : index
    %c0_7 = arith.constant 0 : index
    %c0_8 = arith.constant 0 : index
    %14 = vector.load %arg4[%c0_6, %c0_7, %c0_8] : memref<2x8x8xf32, #tpu.memory_space<vmem>>, vector<2x8x8xf32>
    %15 = arith.addf %13, %14 : vector<2x8x8xf32>
    %cst_9 = arith.constant dense<0xFF800000> : vector<2x8xf32>
    %16 = vector.multi_reduction <maximumf>, %15, %cst_9 [2] : vector<2x8x8xf32> to vector<2x8xf32>
    %17 = vector.shape_cast %16 : vector<2x8xf32> to vector<2x8x1xf32>
    %18 = vector.broadcast %17 : vector<2x8x1xf32> to vector<2x8x8xf32>
    %19 = arith.subf %15, %18 : vector<2x8x8xf32>
    %20 = math.exp %19 : vector<2x8x8xf32>
    %cst_10 = arith.constant dense<0.000000e+00> : vector<2x8xf32>
    %21 = vector.multi_reduction <add>, %20, %cst_10 [2] : vector<2x8x8xf32> to vector<2x8xf32>
    %22 = vector.shape_cast %21 : vector<2x8xf32> to vector<2x8x1xf32>
    %23 = tpu.reciprocal %22 {approx = true} : vector<2x8x1xf32> -> vector<2x8x1xf32>
    %24 = vector.broadcast %23 : vector<2x8x1xf32> to vector<2x8x8xf32>
    %25 = arith.mulf %20, %24 : vector<2x8x8xf32>
    %26 = arith.truncf %25 : vector<2x8x8xf32> to vector<2x8x8xbf16>
    "tpu.trace_start"() <{level = 10 : i32, message = "bqk,bkd->bqd"}> : () -> ()
    %cst_11 = arith.constant dense<0.000000e+00> : vector<2x8x16xf32>
    %27 = tpu.matmul %26, %12, %cst_11 {dimension_numbers = #tpu.dot_dimension_numbers<[2], [1], [1], [2], [0, 0, 0, 1, 1, 2], [0], [0]>} : vector<2x8x8xbf16>, vector<2x8x16xbf16>, vector<2x8x16xf32> -> vector<2x8x16xf32>
    "tpu.trace_stop"() : () -> ()
    %c0_12 = arith.constant 0 : index
    %c0_13 = arith.constant 0 : index
    %c0_14 = arith.constant 0 : index
    %28 = vector.load %arg5[%c0_12, %c0_13, %c0_14] : memref<2x8x16xf32, #tpu.memory_space<vmem>>, vector<2x8x16xf32>
    tpu.vector_store %arg5[%c0_12, %c0_13, %c0_14], %27 {strides = array<i32>} : memref<2x8x16xf32, #tpu.memory_space<vmem>>, vector<2x8x16xf32>,
    return
  }
  func.func @transform_0(%arg0: i32) -> (i32, i32) {
    %c0_i32 = arith.constant 0 : i32
    %c0_i32_0 = arith.constant 0 : i32
    return %arg0, %c0_i32 : i32, i32
  }
  func.func @transform_1(%arg0: i32) -> (i32, i32) {
    %c0_i32 = arith.constant 0 : i32
    %c0_i32_0 = arith.constant 0 : i32
    %c0_i32_1 = arith.constant 0 : i32
    return %c0_i32, %c0_i32_0 : i32, i32
  }
  func.func @transform_2(%arg0: i32) -> (i32, i32) {
    %c0_i32 = arith.constant 0 : i32
    %c0_i32_0 = arith.constant 0 : i32
    %c0_i32_1 = arith.constant 0 : i32
    return %c0_i32, %c0_i32_0 : i32, i32
  }
  func.func @transform_3(%arg0: i32) -> (i32, i32, i32) {
    %c0_i32 = arith.constant 0 : i32
    %c0_i32_0 = arith.constant 0 : i32
    %c0_i32_1 = arith.constant 0 : i32
    return %arg0, %c0_i32, %c0_i32_0 : i32, i32, i32
  }
  func.func @transform_4(%arg0: i32) -> (i32, i32, i32) {
    %c0_i32 = arith.constant 0 : i32
    %c0_i32_0 = arith.constant 0 : i32
    %c0_i32_1 = arith.constant 0 : i32
    return %arg0, %c0_i32, %c0_i32_0 : i32, i32, i32
  }
}

</mosaic_0001>

<llo_original>
// kernel: tpu_custom_call.1
$region0: #{tpu_custom_call.1}
  #allocation0 [shape = 'u32[]', space=smem, size = 0x4, offset = 0x4, fixed_abs, tag = 'smem constant byte address 0x4 - core index']
  #allocation1 [shape = 'u32[144,128]{1,0:T(1,128)}', space=vmem, size = 0x12000, scoped, tag = 'internal scratch']
  %s0 = inlined_call_operand.hbm [shape: bf16[16,32], index: 0, kind: input, shape index: {}]
  %s1 = inlined_call_operand.hbm [shape: bf16[32,48], index: 1, kind: input, shape index: {}]
  %s2 = inlined_call_operand.vmem [shape: f32[1,48], index: 2, kind: input, shape index: {}]
  %s3 = inlined_call_operand.hbm [shape: f32[2,8,8], index: 3, kind: input, shape index: {}]
  %s4 = inlined_call_operand.hbm [shape: f32[2,8,16], index: 4, kind: output, shape index: {}]
  %s5 = sld [smem:[#allocation0]]
  $region38: #{tpu_custom_call.1} parent=0
    _
  %s7 = ssub.s32 1, %s5
  %s8 = scalar_select 0, %s7, %s5
  $region1: #{tpu_custom_call.1} parent=0
    #allocation2 [shape = 'u8[4096]{0}', space=vmem, size = 0x1000, scoped, tag = 'input window, operand 0, single buffered']
    #allocation3 [shape = 's32[1]{0}', space=sflag, size = 0x4, scoped, tag = 'scoped memory for tpu_custom_call.1']
    #allocation4 [shape = 's32[1]{0}', space=sflag, size = 0x4, scoped, tag = 'scoped memory for tpu_custom_call.1']
    #allocation5 [shape = 'u8[8192]{0}', space=vmem, size = 0x2000, scoped, tag = 'input window, operand 1, single buffered']
    #allocation6 [shape = 's32[1]{0}', space=sflag, size = 0x4, scoped, tag = 'scoped memory for tpu_custom_call.1']
    #allocation7 [shape = 'u8[8192]{0}', space=vmem, size = 0x2000, scoped, tag = 'input window, operand 3, single buffered']
    #allocation8 [shape = 'u8[8192]{0}', space=vmem, size = 0x2000, scoped, tag = 'output window, operand 0, single buffered']
    %9 = vsyncpa [#allocation3], 0
    %10 = vsyncpa [#allocation6], 0
    %11 = vsyncpa [#allocation4], 0
    // Predicated region
    $region2: #{tpu_custom_call.1} parent=1 // pred_check
      _
    $region3: #{tpu_custom_call.1} parent=1 // pred_check_branch
      %13 = sbr.rel (0) target = $region5
    $region4: #{tpu_custom_call.1} parent=1 // pred_region
      %s15 = ssub.s32 128, 128
      %16 = vsyncadd [#allocation3], %s15
      %s17 = sshll.u32 [#allocation2], 4
      %s18 = int_to_ptr.vmem [resolvable:$true] %s17
      %23 = dma.hbm_to_vmem [thread:$0]  %s0, 128, %s18, [#allocation3], 64, 64, 4
    $region5: #{tpu_custom_call.1} parent=1 // pred_fallthru
      _
    // Predicated region
    $region6: #{tpu_custom_call.1} parent=1 // pred_check
      _
    $region7: #{tpu_custom_call.1} parent=1 // pred_check_branch
      %25 = sbr.rel (0) target = $region9
    $region8: #{tpu_custom_call.1} parent=1 // pred_region
      %s27 = ssub.s32 256, 256
      %28 = vsyncadd [#allocation6], %s27
      %s29 = sshll.u32 [#allocation5], 4
      %s30 = int_to_ptr.vmem [resolvable:$true] %s29
      %35 = dma.hbm_to_vmem [thread:$0]  %s1, 256, %s30, [#allocation6], 64, 64, 4
    $region9: #{tpu_custom_call.1} parent=1 // pred_fallthru
      _
    // Predicated region
    $region10: #{tpu_custom_call.1} parent=1 // pred_check
      _
    $region11: #{tpu_custom_call.1} parent=1 // pred_check_branch
      %37 = sbr.rel (0) target = $region13
    $region12: #{tpu_custom_call.1} parent=1 // pred_region
      _
    $region13: #{tpu_custom_call.1} parent=1 // pred_fallthru
      _
    // Predicated region
    $region14: #{tpu_custom_call.1} parent=1 // pred_check
      _
    $region15: #{tpu_custom_call.1} parent=1 // pred_check_branch
      %39 = sbr.rel (0) target = $region17
    $region16: #{tpu_custom_call.1} parent=1 // pred_region
      %s41 = ssub.s32 256, 256
      %42 = vsyncadd [#allocation6], %s41
      %s43 = sshll.u32 [#allocation7], 4
      %s44 = int_to_ptr.vmem [resolvable:$true] %s43
      %49 = dma.hbm_to_vmem [thread:$0]  %s3, 256, %s44, [#allocation6], 128, 128, 8
    $region17: #{tpu_custom_call.1} parent=1 // pred_fallthru
      _
    // Predicated region
    $region18: #{tpu_custom_call.1} parent=1 // pred_check
      _
    $region19: #{tpu_custom_call.1} parent=1 // pred_check_branch
      %51 = sbr.rel (0) target = $region21
    $region20: #{tpu_custom_call.1} parent=1 // pred_region
      %52 = dma.done [#allocation3], 128
    $region21: #{tpu_custom_call.1} parent=1 // pred_fallthru
      _
    // Predicated region
    $region22: #{tpu_custom_call.1} parent=1 // pred_check
      _
    $region23: #{tpu_custom_call.1} parent=1 // pred_check_branch
      %54 = sbr.rel (0) target = $region25
    $region24: #{tpu_custom_call.1} parent=1 // pred_region
      %55 = dma.done [#allocation6], 256
    $region25: #{tpu_custom_call.1} parent=1 // pred_fallthru
      _
    // Predicated region
    $region26: #{tpu_custom_call.1} parent=1 // pred_check
      _
    $region27: #{tpu_custom_call.1} parent=1 // pred_check_branch
      %57 = sbr.rel (0) target = $region29
    $region28: #{tpu_custom_call.1} parent=1 // pred_region
      %58 = dma.done [#allocation6], 256
    $region29: #{tpu_custom_call.1} parent=1 // pred_fallthru
      _
    %v60 = vld [vmem:[#allocation2] sm:$0xf]
    %v61 = vld [vmem:[#allocation2 + $0x4] sm:$0xf]
    %v62 = vld [vmem:[#allocation5] sm:$0xf]
    %v63 = vld [vmem:[#allocation5 + $0x4] sm:$0xf]
    %v64 = vld [vmem:[#allocation5 + $0x8] sm:$0xf]
    %v65 = vld [vmem:[#allocation5 + $0xc] sm:$0xf]
    %v66 = vld [vmem:[%s2] sm:$0x1]
    %v68 = vlaneseq
    %v69 = vshrl.u32 %v68, 7
    %v70 = vsub.s32 0, %v69
    %v71 = vrot.slane %v66, %v70
    %v75 = vunpack.c.l.b16 %v60
    %v76 = vunpack.c.l.b16 %v61
    %v77 = vpack.c.b16 %v76, %v75
    %v82 = vunpack.c.l.b16 %v62
    %v83 = vunpack.c.l.b16 %v63
    %v84 = vunpack.c.l.b16 %v64
    %v85 = vunpack.c.l.b16 %v65
    %v86 = vpack.c.b16 %v83, %v82
    %v87 = vpack.c.b16 %v85, %v84
    %vm90 = vcmask 261120
    %v92 = vsel %vm90, %v77, 0
    %94 = vmatprep.subr.bf16.mxu0 0
    %95 = vmatpush1.bf16.msra.mxu0 %v86
    %96 = vmatprep.subr.bf16.mxu0 0
    %97 = vmatpush1.bf16.msra.mxu0 %v87
    %98 = vmatprep.subr.bf16.mxu0 0
    %99 = vmatpush1.bf16.msra.mxu0 0
    %100 = vmatprep.subr.bf16.mxu0 0
    %101 = vmatpush1.bf16.msra.mxu0 0
    %102 = vmatprep.subr.bf16.mxu0 0
    %103 = vmatpush1.bf16.msra.mxu0 0
    %104 = vmatprep.subr.bf16.mxu0 0
    %105 = vmatpush1.bf16.msra.mxu0 0
    %106 = vmatprep.subr.bf16.mxu0 0
    %107 = vmatpush1.bf16.msra.mxu0 0
    %108 = vmatprep.subr.bf16.mxu0 0
    %109 = vmatpush1.bf16.msra.mxu0 0
    %110 = vmatprep.subr.bf16.mxu0 0
    %111 = vmatpush1.bf16.msra.mxu0 0
    %112 = vmatprep.subr.bf16.mxu0 0
    %113 = vmatpush1.bf16.msra.mxu0 0
    %114 = vmatprep.subr.bf16.mxu0 0
    %115 = vmatpush1.bf16.msra.mxu0 0
    %116 = vmatprep.subr.bf16.mxu0 0
    %117 = vmatpush1.bf16.msra.mxu0 0
    %118 = vmatprep.subr.bf16.mxu0 0
    %119 = vmatpush1.bf16.msra.mxu0 0
    %120 = vmatprep.subr.bf16.mxu0 0
    %121 = vmatpush1.bf16.msra.mxu0 0
    %122 = vmatprep.subr.bf16.mxu0 0
    %123 = vmatpush1.bf16.msra.mxu0 0
    %124 = vmatprep.subr.bf16.mxu0 0
    %125 = vmatpush1.bf16.msra.mxu0 0
    %126 = vmatprep.mubr.bf16.mxu0 0
    %127 = vmatmul.mubr.bf16.gmra.mrb[0].mxu0 %v92
    %v128 = vpop.f32.mrb[0].mxu0
    %v129 = vadd.f32 %v71, %v128
    %v130 = vpop.f32.mrb[0].mxu0
    %v131 = vpop.f32.mrb[0].mxu0
    %v132 = vadd.f32 %v71, %v131
    %v133 = vpop.f32.mrb[0].mxu0
    %134 = vdwg.mxu0
    %v135 = vpack.c.bf16 %v129, %v129
    %v136 = vpack.c.bf16 %v132, %v132
    %v137 = vld [vmem:[#allocation7] sm:$0xff]
    %v138 = vld [vmem:[#allocation7 + $0x8] sm:$0xff]
    %140 = vrot.lane.b32.xlu0 %v135, 112
    %v141 = vpop.permute.xlu0 %140
    %vm142 = vcmask 130048
    %v144 = vsel %vm142, %v135, 0
    %v147 = vsel %vm142, %v141, 0
    %149 = vmatprep.subr.bf16.mxu0 0
    %150 = vmatpush1.bf16.xpose.msra.mxu0 %v147
    %151 = vmatprep.subr.bf16.mxu0 0
    %152 = vmatpush1.bf16.xpose.msra.mxu0 0
    %153 = vmatprep.subr.bf16.mxu0 0
    %154 = vmatpush1.bf16.xpose.msra.mxu0 0
    %155 = vmatprep.subr.bf16.mxu0 0
    %156 = vmatpush1.bf16.xpose.msra.mxu0 0
    %157 = vmatprep.subr.bf16.mxu0 0
    %158 = vmatpush1.bf16.xpose.msra.mxu0 0
    %159 = vmatprep.subr.bf16.mxu0 0
    %160 = vmatpush1.bf16.xpose.msra.mxu0 0
    %161 = vmatprep.subr.bf16.mxu0 0
    %162 = vmatpush1.bf16.xpose.msra.mxu0 0
    %163 = vmatprep.subr.bf16.mxu0 0
    %164 = vmatpush1.bf16.xpose.msra.mxu0 0
    %165 = vmatprep.subr.bf16.mxu0 0
    %166 = vmatpush1.bf16.xpose.msra.mxu0 0
    %167 = vmatprep.subr.bf16.mxu0 0
    %168 = vmatpush1.bf16.xpose.msra.mxu0 0
    %169 = vmatprep.subr.bf16.mxu0 0
    %170 = vmatpush1.bf16.xpose.msra.mxu0 0
    %171 = vmatprep.subr.bf16.mxu0 0
    %172 = vmatpush1.bf16.xpose.msra.mxu0 0
    %173 = vmatprep.subr.bf16.mxu0 0
    %174 = vmatpush1.bf16.xpose.msra.mxu0 0
    %175 = vmatprep.subr.bf16.mxu0 0
    %176 = vmatpush1.bf16.xpose.msra.mxu0 0
    %177 = vmatprep.subr.bf16.mxu0 0
    %178 = vmatpush1.bf16.xpose.msra.mxu0 0
    %179 = vmatprep.subr.bf16.mxu0 0
    %180 = vmatpush1.bf16.xpose.msra.mxu0 0
    %181 = vmatprep.mubr.bf16.mxu0 0
    %182 = vmatmul.mubr.bf16.gmra.mrb[0].mxu0 %v144
    %v183 = vpop.f32.mrb[0].mxu0
    %v184 = vadd.f32 %v137, %v183
    %v185 = vpop.f32.mrb[0].mxu0
    %v186 = vpop.f32.mrb[0].mxu0
    %v187 = vpop.f32.mrb[0].mxu0
    %188 = vdwg.mxu0
    %190 = vrot.lane.b32.xlu0 %v136, 112
    %v191 = vpop.permute.xlu0 %190
    %v193 = vsel %vm142, %v136, 0
    %v196 = vsel %vm142, %v191, 0
    %198 = vmatprep.subr.bf16.mxu0 0
    %199 = vmatpush1.bf16.xpose.msra.mxu0 %v196
    %200 = vmatprep.subr.bf16.mxu0 0
    %201 = vmatpush1.bf16.xpose.msra.mxu0 0
    %202 = vmatprep.subr.bf16.mxu0 0
    %203 = vmatpush1.bf16.xpose.msra.mxu0 0
    %204 = vmatprep.subr.bf16.mxu0 0
    %205 = vmatpush1.bf16.xpose.msra.mxu0 0
    %206 = vmatprep.subr.bf16.mxu0 0
    %207 = vmatpush1.bf16.xpose.msra.mxu0 0
    %208 = vmatprep.subr.bf16.mxu0 0
    %209 = vmatpush1.bf16.xpose.msra.mxu0 0
    %210 = vmatprep.subr.bf16.mxu0 0
    %211 = vmatpush1.bf16.xpose.msra.mxu0 0
    %212 = vmatprep.subr.bf16.mxu0 0
    %213 = vmatpush1.bf16.xpose.msra.mxu0 0
    %214 = vmatprep.subr.bf16.mxu0 0
    %215 = vmatpush1.bf16.xpose.msra.mxu0 0
    %216 = vmatprep.subr.bf16.mxu0 0
    %217 = vmatpush1.bf16.xpose.msra.mxu0 0
    %218 = vmatprep.subr.bf16.mxu0 0
    %219 = vmatpush1.bf16.xpose.msra.mxu0 0
    %220 = vmatprep.subr.bf16.mxu0 0
    %221 = vmatpush1.bf16.xpose.msra.mxu0 0
    %222 = vmatprep.subr.bf16.mxu0 0
    %223 = vmatpush1.bf16.xpose.msra.mxu0 0
    %224 = vmatprep.subr.bf16.mxu0 0
    %225 = vmatpush1.bf16.xpose.msra.mxu0 0
    %226 = vmatprep.subr.bf16.mxu0 0
    %227 = vmatpush1.bf16.xpose.msra.mxu0 0
    %228 = vmatprep.subr.bf16.mxu0 0
    %229 = vmatpush1.bf16.xpose.msra.mxu0 0
    %230 = vmatprep.mubr.bf16.mxu0 0
    %231 = vmatmul.mubr.bf16.gmra.mrb[0].mxu0 %v193
    %v232 = vpop.f32.mrb[0].mxu0
    %v233 = vadd.f32 %v138, %v232
    %v234 = vpop.f32.mrb[0].mxu0
    %v235 = vpop.f32.mrb[0].mxu0
    %v236 = vpop.f32.mrb[0].mxu0
    %237 = vdwg.mxu0
    %vm238 = vcmask 64512
    %v239 = vsel %vm238, %v184, -inf
    %240 = vmax.xlane.f32.xlu0 %v239
    %v241 = vpop.xlane.xlu0 %240
    %v242 = vsel %vm238, %v233, -inf
    %243 = vmax.xlane.f32.xlu0 %v242
    %v244 = vpop.xlane.xlu0 %243
    %v245 = vsub.f32 %v184, %v241
    %v246 = vsub.f32 %v233, %v244
    %v247 = vmul.f32 %v245, 1.442695
    %v248 = vpow.pop %v247
    %v249 = vmul.f32 %v246, 1.442695
    %v250 = vpow.pop %v249
    %v251 = vsel %vm238, %v248, 0.0
    %252 = vadd.xlane.f32.xlu0 %v251
    %v253 = vpop.xlane.xlu0 %252
    %v254 = vsel %vm238, %v250, 0.0
    %255 = vadd.xlane.f32.xlu0 %v254
    %v256 = vpop.xlane.xlu0 %255
    %v257 = vrcp.pop %v253
    %v258 = vrcp.pop %v256
    %v259 = vmul.f32 %v248, %v257
    %v260 = vmul.f32 %v250, %v258
    %v261 = vpack.c.bf16 %v259, %v259
    %v262 = vpack.c.bf16 %v260, %v260
    %263 = vrot.lane.b32.xlu0 %v135, 96
    %v264 = vpop.permute.xlu0 %263
    %v266 = vsel %vm238, %v261, 0
    %vm268 = vcmask 1043456
    %v270 = vsel %vm268, %v264, 0
    %272 = vmatprep.subr.bf16.mxu0 0
    %273 = vmatpush1.bf16.msra.mxu0 %v270
    %274 = vmatprep.subr.bf16.mxu0 0
    %275 = vmatpush1.bf16.msra.mxu0 0
    %276 = vmatprep.subr.bf16.mxu0 0
    %277 = vmatpush1.bf16.msra.mxu0 0
    %278 = vmatprep.subr.bf16.mxu0 0
    %279 = vmatpush1.bf16.msra.mxu0 0
    %280 = vmatprep.subr.bf16.mxu0 0
    %281 = vmatpush1.bf16.msra.mxu0 0
    %282 = vmatprep.subr.bf16.mxu0 0
    %283 = vmatpush1.bf16.msra.mxu0 0
    %284 = vmatprep.subr.bf16.mxu0 0
    %285 = vmatpush1.bf16.msra.mxu0 0
    %286 = vmatprep.subr.bf16.mxu0 0
    %287 = vmatpush1.bf16.msra.mxu0 0
    %288 = vmatprep.subr.bf16.mxu0 0
    %289 = vmatpush1.bf16.msra.mxu0 0
    %290 = vmatprep.subr.bf16.mxu0 0
    %291 = vmatpush1.bf16.msra.mxu0 0
    %292 = vmatprep.subr.bf16.mxu0 0
    %293 = vmatpush1.bf16.msra.mxu0 0
    %294 = vmatprep.subr.bf16.mxu0 0
    %295 = vmatpush1.bf16.msra.mxu0 0
    %296 = vmatprep.subr.bf16.mxu0 0
    %297 = vmatpush1.bf16.msra.mxu0 0
    %298 = vmatprep.subr.bf16.mxu0 0
    %299 = vmatpush1.bf16.msra.mxu0 0
    %300 = vmatprep.subr.bf16.mxu0 0
    %301 = vmatpush1.bf16.msra.mxu0 0
    %302 = vmatprep.subr.bf16.mxu0 0
    %303 = vmatpush1.bf16.msra.mxu0 0
    %304 = vmatprep.mubr.bf16.mxu0 0
    %305 = vmatmul.mubr.bf16.gmra.mrb[0].mxu0 %v266
    %v306 = vpop.f32.mrb[0].mxu0
    %v307 = vadd.f32 0.0, %v306
    %v308 = vpop.f32.mrb[0].mxu0
    %v309 = vpop.f32.mrb[0].mxu0
    %v310 = vpop.f32.mrb[0].mxu0
    %311 = vdwg.mxu0
    %312 = vrot.lane.b32.xlu0 %v136, 96
    %v313 = vpop.permute.xlu0 %312
    %v315 = vsel %vm238, %v262, 0
    %v318 = vsel %vm268, %v313, 0
    %320 = vmatprep.subr.bf16.mxu0 0
    %321 = vmatpush1.bf16.msra.mxu0 %v318
    %322 = vmatprep.subr.bf16.mxu0 0
    %323 = vmatpush1.bf16.msra.mxu0 0
    %324 = vmatprep.subr.bf16.mxu0 0
    %325 = vmatpush1.bf16.msra.mxu0 0
    %326 = vmatprep.subr.bf16.mxu0 0
    %327 = vmatpush1.bf16.msra.mxu0 0
    %328 = vmatprep.subr.bf16.mxu0 0
    %329 = vmatpush1.bf16.msra.mxu0 0
    %330 = vmatprep.subr.bf16.mxu0 0
    %331 = vmatpush1.bf16.msra.mxu0 0
    %332 = vmatprep.subr.bf16.mxu0 0
    %333 = vmatpush1.bf16.msra.mxu0 0
    %334 = vmatprep.subr.bf16.mxu0 0
    %335 = vmatpush1.bf16.msra.mxu0 0
    %336 = vmatprep.subr.bf16.mxu0 0
    %337 = vmatpush1.bf16.msra.mxu0 0
    %338 = vmatprep.subr.bf16.mxu0 0
    %339 = vmatpush1.bf16.msra.mxu0 0
    %340 = vmatprep.subr.bf16.mxu0 0
    %341 = vmatpush1.bf16.msra.mxu0 0
    %342 = vmatprep.subr.bf16.mxu0 0
    %343 = vmatpush1.bf16.msra.mxu0 0
    %344 = vmatprep.subr.bf16.mxu0 0
    %345 = vmatpush1.bf16.msra.mxu0 0
    %346 = vmatprep.subr.bf16.mxu0 0
    %347 = vmatpush1.bf16.msra.mxu0 0
    %348 = vmatprep.subr.bf16.mxu0 0
    %349 = vmatpush1.bf16.msra.mxu0 0
    %350 = vmatprep.subr.bf16.mxu0 0
    %351 = vmatpush1.bf16.msra.mxu0 0
    %352 = vmatprep.mubr.bf16.mxu0 0
    %353 = vmatmul.mubr.bf16.gmra.mrb[0].mxu0 %v315
    %v354 = vpop.f32.mrb[0].mxu0
    %v355 = vadd.f32 0.0, %v354
    %v356 = vpop.f32.mrb[0].mxu0
    %v357 = vpop.f32.mrb[0].mxu0
    %v358 = vpop.f32.mrb[0].mxu0
    %359 = vdwg.mxu0
    %360 = vst.msk [vmem:[#allocation8] sm:$0xff] %vm142, %v307
    %361 = vst.msk [vmem:[#allocation8 + $0x8] sm:$0xff] %vm142, %v355
    // Predicated region
    $region30: #{tpu_custom_call.1} parent=1 // pred_check
      _
    $region31: #{tpu_custom_call.1} parent=1 // pred_check_branch
      %363 = sbr.rel (0) target = $region33
    $region32: #{tpu_custom_call.1} parent=1 // pred_region
      %s365 = ssub.s32 256, 256
      %366 = vsyncadd [#allocation4], %s365
      %s367 = sshll.u32 [#allocation8], 4
      %s368 = int_to_ptr.vmem [resolvable:$true] %s367
      %373 = dma.vmem_to_hbm [thread:$0]  %s368, 256, %s4, [#allocation4], 128, 128, 8
    $region33: #{tpu_custom_call.1} parent=1 // pred_fallthru
      _
    // Predicated region
    $region34: #{tpu_custom_call.1} parent=1 // pred_check
      _
    $region35: #{tpu_custom_call.1} parent=1 // pred_check_branch
      %375 = sbr.rel (0) target = $region37
    $region36: #{tpu_custom_call.1} parent=1 // pred_region
      %376 = dma.done [#allocation4], 256
    $region37: #{tpu_custom_call.1} parent=1 // pred_fallthru
      _
    %377 = vsyncpa [#allocation3], 1
    %378 = vsyncpa [#allocation6], 1
    %379 = vsyncpa [#allocation4], 1

</llo_original>
